<compile_context>
chip_gen: v5e
topology: v5e:2x2
jax: 0.10.0
libtpu: 0.0.40
codegen_flags: <defaults>
</compile_context>

<pallas_src>
import functools
import math
from functools import partial

import numpy as np

import jax
import jax.numpy as jnp
from jax.experimental import pallas as pl
from jax.experimental.pallas import tpu as pltpu


def _adaptive_pool_matrix(in_size: int, out_size: int) -> np.ndarray:
    """(out_size, in_size) matrix; row i averages input[floor(i*I/O) : ceil((i+1)*I/O)].

    Matches torch.nn.AdaptiveAvgPool2d window boundaries exactly.
    """
    mat = np.zeros((out_size, in_size), np.float32)
    for i in range(out_size):
        start = (i * in_size) // out_size
        end = -((-(i + 1) * in_size) // out_size)  # ceil
        mat[i, start:end] = 1.0 / (end - start)
    return mat


@functools.lru_cache(maxsize=None)
def _pool_matrix_np(h: int, oh: int, ow: int) -> np.ndarray:
    # Separable pooling as one token-mixing matrix on row-major tokens (t = y*h + x).
    return np.kron(_adaptive_pool_matrix(h, oh), _adaptive_pool_matrix(h, ow))


def _tpu_vmem_and_megacore():
    """Physical VMEM bytes per TensorCore and whether the chip has 2 TCs (v7x)."""
    vmem = None
    try:
        vmem = int(pltpu.get_tpu_info().vmem_capacity_bytes)
    except Exception:
        vmem = None
    kind = ""
    try:
        kind = jax.devices()[0].device_kind.lower()
    except Exception:
        pass
    if vmem is None:
        vmem = (64 << 20) if "v7" in kind else (128 << 20)
    megacore = ("v7" in kind) or (vmem <= (64 << 20))
    return vmem, megacore


def _token_down_kernel(p_ref, x_ref, o_ref):
    """o[i] = P @ x[i] for each batch row in the tile (MXU matmul).

    p_ref: (m, n)       f32 pooling matrix, resident across the grid
    x_ref: (bt, n, tc)  input tokens, channels on the lane axis
    o_ref: (bt, m, tc)  pooled tokens
    """
    p = p_ref[...]

    def body(i, carry):
        xi = x_ref[i].astype(jnp.float32)  # (n, tc)
        yi = jnp.dot(
            p, xi,
            preferred_element_type=jnp.float32,
            precision=jax.lax.Precision.HIGHEST,
        )
        o_ref[i] = yi.astype(o_ref.dtype)
        return carry

    jax.lax.fori_loop(0, x_ref.shape[0], body, 0)


def token_down_layer(x, output_size):
    """x: (b, num_tokens, c); output_size: int or (oh, ow). Returns (b, oh*ow, c)."""
    if isinstance(output_size, int):
        output_size = (output_size, output_size)
    oh, ow = output_size

    b, num_tokens, c = x.shape
    h = int(math.sqrt(num_tokens))
    assert h * h == num_tokens, "num_tokens must be a perfect square"
    n, m = num_tokens, oh * ow

    # Pooling matrix stays f32 (exact window averaging even for bf16 activations).
    p = jnp.asarray(_pool_matrix_np(h, oh, ow), dtype=jnp.float32)

    itemsize = jnp.dtype(x.dtype).itemsize

    # Per-generation VMEM budget: ~37.5% of physical VMEM for the working set,
    # and an explicit vmem_limit_bytes with headroom (needed on v5e's 16 MiB and
    # v6e/v7x's 32 MiB default scoped limits).
    vmem_cap, megacore = _tpu_vmem_and_megacore()
    budget = int(vmem_cap * 0.375)                      # 48 MiB v5e/v6e, 24 MiB v7x
    vmem_limit = int(min(vmem_cap * 0.75, budget + (16 << 20)))

    # Channel tile: largest multiple-of-128 divisor of c, capped at 1024.
    if c % 128 == 0:
        tc = 128
        for t in range(128, min(c, 1024) + 1, 128):
            if c % t == 0:
                tc = t
    else:
        tc = c  # full extent (kept correct; stores become masked)

    def working_set(bt_):
        return (
            2 * bt_ * n * tc * itemsize    # double-buffered x tile
            + 2 * bt_ * m * tc * itemsize  # double-buffered out tile
            + 2 * m * n * 4                # P (f32), counted double-buffered
            + (n + m) * tc * 4             # per-row f32 temporaries in the dot
        )

    divisors = [d for d in range(1, b + 1) if b % d == 0]
    fitting = [d for d in divisors if working_set(d) <= budget] or [1]
    bt = max(fitting)
    if megacore:
        # Prefer an even total step count so both v7x TensorCores stay busy.
        even = [d for d in fitting if ((b // d) * (c // tc)) % 2 == 0]
        if even:
            bt = max(even)

    grid = (b // bt, c // tc)

    out = pl.pallas_call(
        _token_down_kernel,
        out_shape=jax.ShapeDtypeStruct((b, m, c), x.dtype),
        grid_spec=pltpu.PrefetchScalarGridSpec(
            num_scalar_prefetch=0,
            grid=grid,
            in_specs=[
                pl.BlockSpec((m, n), lambda i, j: (0, 0)),          # pooling matrix
                pl.BlockSpec((bt, n, tc), lambda i, j: (i, 0, j)),  # input tokens
            ],
            out_specs=pl.BlockSpec((bt, m, tc), lambda i, j: (i, 0, j)),
        ),
        compiler_params=pltpu.CompilerParams(
            dimension_semantics=("parallel", "parallel"),
            vmem_limit_bytes=vmem_limit,
        ),
    )(p, x)
    return out


if __name__ == "__main__":
    key = jax.random.PRNGKey(0)
    b, c, h = 2, 128, 16          # C = 128 -> lane-dense loads/stores
    oh, ow = 8, 8                 # TokenDownLayer(shape=(8, 8))
    num_tokens = h * h

    x = jax.random.normal(key, (b, num_tokens, c), jnp.float32)

    # jit so np.kron / P host->device transfer are baked as constants.
    fwd = jax.jit(partial(token_down_layer, output_size=(oh, ow)))
    y = jax.block_until_ready(fwd(x))
    assert y.shape == (b, oh * ow, c)

    # Reference (divisible case): mean over 2x2 token windows.
    feat = x.reshape(b, h, h, c)
    kh, kw = h // oh, h // ow
    y_ref = feat.reshape(b, oh, kh, ow, kw, c).mean(axis=(2, 4)).reshape(b, oh * ow, c)
    assert jnp.allclose(y, y_ref, atol=1e-4, rtol=1e-4)

    # General (non-divisible) adaptive-pool case, checked against explicit windows.
    oh2, ow2 = 7, 5
    y2 = jax.block_until_ready(
        jax.jit(partial(token_down_layer, output_size=(oh2, ow2)))(x))
    feat_np = np.asarray(feat)
    ref2 = np.zeros((b, oh2, ow2, c), np.float32)
    for i in range(oh2):
        ys, ye = (i * h) // oh2, -((-(i + 1) * h) // oh2)
        for j in range(ow2):
            xs, xe = (j * h) // ow2, -((-(j + 1) * h) // ow2)
            ref2[:, i, j, :] = feat_np[:, ys:ye, xs:xe, :].mean(axis=(1, 2))
    ref2 = ref2.reshape(b, oh2 * ow2, c)
    assert jnp.allclose(y2, jnp.asarray(ref2), atol=1e-4, rtol=1e-4)

    print("KERNEL_OK")
</pallas_src>

<mosaic_0001>
module attributes {stable_mosaic.version = 11 : i64} {
  func.func @_token_down_kernel(%arg0: i32, %arg1: i32, %arg2: memref<64x256xf32, #tpu.memory_space<vmem>>, %arg3: memref<2x256x128xf32, #tpu.memory_space<vmem>>, %arg4: memref<2x64x128xf32, #tpu.memory_space<vmem>>) attributes {dimension_semantics = [#tpu.dimension_semantics<parallel>, #tpu.dimension_semantics<parallel>], iteration_bounds = array<i64: 1, 1>, scalar_prefetch = 0 : i64, scratch_operands = 0 : i64, tpu.core_type = #tpu.core_type<tc>, window_params = [{pipeline_mode = #tpu.pipeline_mode<synchronous>, transform_indices = @transform_0, window_bounds = array<i64: 64, 256>}, {transform_indices = @transform_1, window_bounds = array<i64: 2, 256, 128>}, {transform_indices = @transform_2, window_bounds = array<i64: 2, 64, 128>}]} {
    %c0 = arith.constant 0 : index
    %c0_0 = arith.constant 0 : index
    %0 = vector.load %arg2[%c0, %c0_0] : memref<64x256xf32, #tpu.memory_space<vmem>>, vector<64x256xf32>
    %c0_i32 = arith.constant 0 : i32
    %c2_i32 = arith.constant 2 : i32
    %1 = arith.addi %c0_i32, %c2_i32 : i32
    %c1_i32 = arith.constant 1 : i32
    scf.for %arg5 = %c0_i32 to %1 step %c1_i32  : i32 {
      %2 = arith.index_cast %arg5 : i32 to index
      %c0_2 = arith.constant 0 : index
      %c0_3 = arith.constant 0 : index
      %3 = vector.load %arg3[%2, %c0_2, %c0_3] : memref<2x256x128xf32, #tpu.memory_space<vmem>>, vector<1x256x128xf32>
      %4 = vector.shape_cast %3 : vector<1x256x128xf32> to vector<256x128xf32>
      %cst = arith.constant dense<0.000000e+00> : vector<64x128xf32>
      %5 = tpu.matmul %0, %4, %cst {dimension_numbers = #tpu.dot_dimension_numbers<[1], [0], [0], [1], [0, 0, 1, 1], [], []>, precision = #tpu.contract_precision<fp32>} : vector<64x256xf32>, vector<256x128xf32>, vector<64x128xf32> -> vector<64x128xf32>
      %6 = arith.index_cast %arg5 : i32 to index
      %c0_4 = arith.constant 0 : index
      %c0_5 = arith.constant 0 : index
      %7 = vector.load %arg4[%6, %c0_4, %c0_5] : memref<2x64x128xf32, #tpu.memory_space<vmem>>, vector<1x64x128xf32>
      %8 = vector.shape_cast %7 : vector<1x64x128xf32> to vector<64x128xf32>
      %9 = vector.shape_cast %5 : vector<64x128xf32> to vector<1x64x128xf32>
      tpu.vector_store %arg4[%6, %c0_4, %c0_5], %9 {strides = array<i32>} : memref<2x64x128xf32, #tpu.memory_space<vmem>>, vector<1x64x128xf32>,
    }
    %c2_i32_1 = arith.constant 2 : i32
    return
  }
  func.func @transform_0(%arg0: i32, %arg1: i32) -> (i32, i32) {
    %c0_i32 = arith.constant 0 : i32
    %c0_i32_0 = arith.constant 0 : i32
    %c0_i32_1 = arith.constant 0 : i32
    return %c0_i32, %c0_i32_0 : i32, i32
  }
  func.func @transform_1(%arg0: i32, %arg1: i32) -> (i32, i32, i32) {
    %c0_i32 = arith.constant 0 : i32
    %c0_i32_0 = arith.constant 0 : i32
    return %arg0, %c0_i32, %arg1 : i32, i32, i32
  }
  func.func @transform_2(%arg0: i32, %arg1: i32) -> (i32, i32, i32) {
    %c0_i32 = arith.constant 0 : i32
    %c0_i32_0 = arith.constant 0 : i32
    return %arg0, %c0_i32, %arg1 : i32, i32, i32
  }
}

</mosaic_0001>

<llo_original>
// kernel: token_down_layer.1
$region0: #{token_down_layer.1}
  #allocation0 [shape = 'u32[]', space=smem, size = 0x4, offset = 0x4, fixed_abs, tag = 'smem constant byte address 0x4 - core index']
  #allocation1 [shape = 'u32[72,128]{1,0:T(1,128)}', space=vmem, size = 0x9000, scoped, tag = 'internal scratch']
  %s0 = inlined_call_operand.hbm [shape: f32[64,256], index: 0, kind: input, shape index: {}]
  %s1 = inlined_call_operand.hbm [shape: f32[2,256,128], index: 1, kind: input, shape index: {}]
  %s2 = inlined_call_operand.hbm [shape: f32[2,64,128], index: 2, kind: output, shape index: {}]
  %s3 = sld [smem:[#allocation0]]
  $region33: #{token_down_layer.1} parent=0
    _
  %s5 = ssub.s32 1, %s3
  %s6 = scalar_select 0, %s5, %s3
  $region1: #{token_down_layer.1} parent=0
    #allocation2 [shape = 'u8[65536]{0}', space=vmem, size = 0x10000, scoped, tag = 'input window, operand 0, single buffered']
    #allocation3 [shape = 's32[1]{0}', space=sflag, size = 0x4, scoped, tag = 'scoped memory for token_down_layer.1']
    #allocation4 [shape = 's32[1]{0}', space=sflag, size = 0x4, scoped, tag = 'scoped memory for token_down_layer.1']
    #allocation5 [shape = 'u8[262144]{0}', space=vmem, size = 0x40000, scoped, tag = 'input window, operand 1, single buffered']
    #allocation6 [shape = 's32[1]{0}', space=sflag, size = 0x4, scoped, tag = 'scoped memory for token_down_layer.1']
    #allocation7 [shape = 'u8[65536]{0}', space=vmem, size = 0x10000, scoped, tag = 'output window, operand 0, single buffered']
    %7 = vsyncpa [#allocation3], 0
    %8 = vsyncpa [#allocation6], 0
    %9 = vsyncpa [#allocation4], 0
    // Predicated region
    $region2: #{token_down_layer.1} parent=1 // pred_check
      _
    $region3: #{token_down_layer.1} parent=1 // pred_check_branch
      %11 = sbr.rel (0) target = $region5
    $region4: #{token_down_layer.1} parent=1 // pred_region
      %13 = vsyncadd [#allocation3], 0
      %s14 = sshll.u32 %s0, 4
      %s15 = int_to_ptr.hbm [resolvable:$true] %s14
      %s16 = sshll.u32 [#allocation2], 4
      %s17 = int_to_ptr.vmem [resolvable:$true] %s16
      %22 = dma.hbm_to_vmem [thread:$0]  %s15, 2048, %s17, [#allocation3], 256, 256, 16
    $region5: #{token_down_layer.1} parent=1 // pred_fallthru
      _
    // Predicated region
    $region6: #{token_down_layer.1} parent=1 // pred_check
      _
    $region7: #{token_down_layer.1} parent=1 // pred_check_branch
      %24 = sbr.rel (0) target = $region9
    $region8: #{token_down_layer.1} parent=1 // pred_region
      %26 = vsyncadd [#allocation6], 0
      %s27 = sshll.u32 %s1, 4
      %s28 = int_to_ptr.hbm [resolvable:$true] %s27
      %s29 = sshll.u32 [#allocation5], 4
      %s30 = int_to_ptr.vmem [resolvable:$true] %s29
      %35 = dma.hbm_to_vmem [thread:$0]  %s28, 8192, %s30, [#allocation6], 128, 128, 8
    $region9: #{token_down_layer.1} parent=1 // pred_fallthru
      _
    // Predicated region
    $region10: #{token_down_layer.1} parent=1 // pred_check
      _
    $region11: #{token_down_layer.1} parent=1 // pred_check_branch
      %37 = sbr.rel (0) target = $region13
    $region12: #{token_down_layer.1} parent=1 // pred_region
      %39 = dma.done [#allocation3], 2048
    $region13: #{token_down_layer.1} parent=1 // pred_fallthru
      _
    // Predicated region
    $region14: #{token_down_layer.1} parent=1 // pred_check
      _
    $region15: #{token_down_layer.1} parent=1 // pred_check_branch
      %41 = sbr.rel (0) target = $region17
    $region16: #{token_down_layer.1} parent=1 // pred_region
      %43 = dma.done [#allocation6], 8192
    $region17: #{token_down_layer.1} parent=1 // pred_fallthru
      _
    %v44 = vld [vmem:[#allocation2] sm:$0xff]
    %v45 = vld [vmem:[#allocation2 + $0x8] sm:$0xff]
    %v46 = vld [vmem:[#allocation2 + $0x10] sm:$0xff]
    %v47 = vld [vmem:[#allocation2 + $0x18] sm:$0xff]
    %v48 = vld [vmem:[#allocation2 + $0x20] sm:$0xff]
    %v49 = vld [vmem:[#allocation2 + $0x28] sm:$0xff]
    %v50 = vld [vmem:[#allocation2 + $0x30] sm:$0xff]
    %v51 = vld [vmem:[#allocation2 + $0x38] sm:$0xff]
    %v52 = vld [vmem:[#allocation2 + $0x40] sm:$0xff]
    %v53 = vld [vmem:[#allocation2 + $0x48] sm:$0xff]
    %v54 = vld [vmem:[#allocation2 + $0x50] sm:$0xff]
    %v55 = vld [vmem:[#allocation2 + $0x58] sm:$0xff]
    %v56 = vld [vmem:[#allocation2 + $0x60] sm:$0xff]
    %v57 = vld [vmem:[#allocation2 + $0x68] sm:$0xff]
    %v58 = vld [vmem:[#allocation2 + $0x70] sm:$0xff]
    %v59 = vld [vmem:[#allocation2 + $0x78] sm:$0xff]
    loop: start=0, step=1, limit=2
    $region18: #{token_down_layer.1} parent=1 // loop_pre_header
      _
    $region19: #{token_down_layer.1} parent=1 // loop_header
      %s61 = sphi 0, %s65
      %p62 = scmp.ge.s32.totalorder %s61, 2
    $region20: #{token_down_layer.1} parent=1 // loop_header_branch
      %64 = sbr.rel (%p62) target = $region24
    $region21: #{token_down_layer.1} parent=1 // loop_body
      %s66 = smul.u32 %s61, 256
      %s67 = scalar_lea.vmem [#allocation5], %s66
      %v68 = vld [vmem:[%s67] sm:$0xff]
      %v69 = vld [vmem:[%s67 + $0x8] sm:$0xff]
      %v70 = vld [vmem:[%s67 + $0x10] sm:$0xff]
      %v71 = vld [vmem:[%s67 + $0x18] sm:$0xff]
      %v72 = vld [vmem:[%s67 + $0x20] sm:$0xff]
      %v73 = vld [vmem:[%s67 + $0x28] sm:$0xff]
      %v74 = vld [vmem:[%s67 + $0x30] sm:$0xff]
      %v75 = vld [vmem:[%s67 + $0x38] sm:$0xff]
      %v76 = vld [vmem:[%s67 + $0x40] sm:$0xff]
      %v77 = vld [vmem:[%s67 + $0x48] sm:$0xff]
      %v78 = vld [vmem:[%s67 + $0x50] sm:$0xff]
      %v79 = vld [vmem:[%s67 + $0x58] sm:$0xff]
      %v80 = vld [vmem:[%s67 + $0x60] sm:$0xff]
      %v81 = vld [vmem:[%s67 + $0x68] sm:$0xff]
      %v82 = vld [vmem:[%s67 + $0x70] sm:$0xff]
      %v83 = vld [vmem:[%s67 + $0x78] sm:$0xff]
      %v84 = vld [vmem:[%s67 + $0x80] sm:$0xff]
      %v85 = vld [vmem:[%s67 + $0x88] sm:$0xff]
      %v86 = vld [vmem:[%s67 + $0x90] sm:$0xff]
      %v87 = vld [vmem:[%s67 + $0x98] sm:$0xff]
      %v88 = vld [vmem:[%s67 + $0xa0] sm:$0xff]
      %v89 = vld [vmem:[%s67 + $0xa8] sm:$0xff]
      %v90 = vld [vmem:[%s67 + $0xb0] sm:$0xff]
      %v91 = vld [vmem:[%s67 + $0xb8] sm:$0xff]
      %v92 = vld [vmem:[%s67 + $0xc0] sm:$0xff]
      %v93 = vld [vmem:[%s67 + $0xc8] sm:$0xff]
      %v94 = vld [vmem:[%s67 + $0xd0] sm:$0xff]
      %v95 = vld [vmem:[%s67 + $0xd8] sm:$0xff]
      %v96 = vld [vmem:[%s67 + $0xe0] sm:$0xff]
      %v97 = vld [vmem:[%s67 + $0xe8] sm:$0xff]
      %v98 = vld [vmem:[%s67 + $0xf0] sm:$0xff]
      %v99 = vld [vmem:[%s67 + $0xf8] sm:$0xff]
      %v100 = vand.u32 %v83, 4294901760
      %101 = vmatpush.msra.mxu0 %v100
      %v102 = vand.u32 %v82, 4294901760
      %103 = vmatpush.msra.mxu0 %v102
      %v104 = vand.u32 %v81, 4294901760
      %105 = vmatpush.msra.mxu0 %v104
      %v106 = vand.u32 %v80, 4294901760
      %107 = vmatpush.msra.mxu0 %v106
      %v108 = vand.u32 %v79, 4294901760
      %109 = vmatpush.msra.mxu0 %v108
      %v110 = vand.u32 %v78, 4294901760
      %111 = vmatpush.msra.mxu0 %v110
      %v112 = vand.u32 %v77, 4294901760
      %113 = vmatpush.msra.mxu0 %v112
      %v114 = vand.u32 %v76, 4294901760
      %115 = vmatpush.msra.mxu0 %v114
      %v116 = vand.u32 %v75, 4294901760
      %117 = vmatpush.msra.mxu0 %v116
      %v118 = vand.u32 %v74, 4294901760
      %119 = vmatpush.msra.mxu0 %v118
      %v120 = vand.u32 %v73, 4294901760
      %121 = vmatpush.msra.mxu0 %v120
      %v122 = vand.u32 %v72, 4294901760
      %123 = vmatpush.msra.mxu0 %v122
      %v124 = vand.u32 %v71, 4294901760
      %125 = vmatpush.msra.mxu0 %v124
      %v126 = vand.u32 %v70, 4294901760
      %127 = vmatpush.msra.mxu0 %v126
      %v128 = vand.u32 %v69, 4294901760
      %129 = vmatpush.msra.mxu0 %v128
      %v130 = vand.u32 %v68, 4294901760
      %131 = vmatpush.msra.mxu0 %v130
      %v132 = vand.u32 %v44, 4294901760
      %v133 = vsub.f32 %v44, %v132
      %v134 = vand.u32 %v133, 4294901760
      %v135 = vsub.f32 %v133, %v134
      %v136 = vand.u32 %v135, 4294901760
      %137 = vmatmul.f32.gmra.mxu0 %v136
      %v138 = vpop.f32.mrf.mxu0
      %v139 = vadd.f32 0.0, %v138
      %v140 = vand.u32 %v46, 4294901760
      %v141 = vsub.f32 %v46, %v140
      %v142 = vand.u32 %v141, 4294901760
      %v143 = vsub.f32 %v141, %v142
      %v144 = vand.u32 %v143, 4294901760
      %145 = vmatmul.f32.gmra.mxu0 %v144
      %v146 = vpop.f32.mrf.mxu0
      %v147 = vadd.f32 0.0, %v146
      %v148 = vand.u32 %v48, 4294901760
      %v149 = vsub.f32 %v48, %v148
      %v150 = vand.u32 %v149, 4294901760
      %v151 = vsub.f32 %v149, %v150
      %v152 = vand.u32 %v151, 4294901760
      %153 = vmatmul.f32.gmra.mxu0 %v152
      %v154 = vpop.f32.mrf.mxu0
      %v155 = vadd.f32 0.0, %v154
      %v156 = vand.u32 %v50, 4294901760
      %v157 = vsub.f32 %v50, %v156
      %v158 = vand.u32 %v157, 4294901760
      %v159 = vsub.f32 %v157, %v158
      %v160 = vand.u32 %v159, 4294901760
      %161 = vmatmul.f32.gmra.mxu0 %v160
      %v162 = vpop.f32.mrf.mxu0
      %v163 = vadd.f32 0.0, %v162
      %v164 = vand.u32 %v52, 4294901760
      %v165 = vsub.f32 %v52, %v164
      %v166 = vand.u32 %v165, 4294901760
      %v167 = vsub.f32 %v165, %v166
      %v168 = vand.u32 %v167, 4294901760
      %169 = vmatmul.f32.gmra.mxu0 %v168
      %v170 = vpop.f32.mrf.mxu0
      %v171 = vadd.f32 0.0, %v170
      %v172 = vand.u32 %v54, 4294901760
      %v173 = vsub.f32 %v54, %v172
      %v174 = vand.u32 %v173, 4294901760
      %v175 = vsub.f32 %v173, %v174
      %v176 = vand.u32 %v175, 4294901760
      %177 = vmatmul.f32.gmra.mxu0 %v176
      %v178 = vpop.f32.mrf.mxu0
      %v179 = vadd.f32 0.0, %v178
      %v180 = vand.u32 %v56, 4294901760
      %v181 = vsub.f32 %v56, %v180
      %v182 = vand.u32 %v181, 4294901760
      %v183 = vsub.f32 %v181, %v182
      %v184 = vand.u32 %v183, 4294901760
      %185 = vmatmul.f32.gmra.mxu0 %v184
      %v186 = vpop.f32.mrf.mxu0
      %v187 = vadd.f32 0.0, %v186
      %v188 = vand.u32 %v58, 4294901760
      %v189 = vsub.f32 %v58, %v188
      %v190 = vand.u32 %v189, 4294901760
      %v191 = vsub.f32 %v189, %v190
      %v192 = vand.u32 %v191, 4294901760
      %193 = vmatmul.f32.gmra.mxu0 %v192
      %v194 = vpop.f32.mrf.mxu0
      %v195 = vadd.f32 0.0, %v194
      %196 = vdwg.mxu0
      %v197 = vand.u32 %v83, 4294901760
      %v198 = vsub.f32 %v83, %v197
      %v199 = vand.u32 %v198, 4294901760
      %v200 = vsub.f32 %v198, %v199
      %v201 = vand.u32 %v200, 4294901760
      %202 = vmatpush.msra.mxu0 %v201
      %v203 = vand.u32 %v82, 4294901760
      %v204 = vsub.f32 %v82, %v203
      %v205 = vand.u32 %v204, 4294901760
      %v206 = vsub.f32 %v204, %v205
      %v207 = vand.u32 %v206, 4294901760
      %208 = vmatpush.msra.mxu0 %v207
      %v209 = vand.u32 %v81, 4294901760
      %v210 = vsub.f32 %v81, %v209
      %v211 = vand.u32 %v210, 4294901760
      %v212 = vsub.f32 %v210, %v211
      %v213 = vand.u32 %v212, 4294901760
      %214 = vmatpush.msra.mxu0 %v213
      %v215 = vand.u32 %v80, 4294901760
      %v216 = vsub.f32 %v80, %v215
      %v217 = vand.u32 %v216, 4294901760
      %v218 = vsub.f32 %v216, %v217
      %v219 = vand.u32 %v218, 4294901760
      %220 = vmatpush.msra.mxu0 %v219
      %v221 = vand.u32 %v79, 4294901760
      %v222 = vsub.f32 %v79, %v221
      %v223 = vand.u32 %v222, 4294901760
      %v224 = vsub.f32 %v222, %v223
      %v225 = vand.u32 %v224, 4294901760
      %226 = vmatpush.msra.mxu0 %v225
      %v227 = vand.u32 %v78, 4294901760
      %v228 = vsub.f32 %v78, %v227
      %v229 = vand.u32 %v228, 4294901760
      %v230 = vsub.f32 %v228, %v229
      %v231 = vand.u32 %v230, 4294901760
      %232 = vmatpush.msra.mxu0 %v231
      %v233 = vand.u32 %v77, 4294901760
      %v234 = vsub.f32 %v77, %v233
      %v235 = vand.u32 %v234, 4294901760
      %v236 = vsub.f32 %v234, %v235
      %v237 = vand.u32 %v236, 4294901760
      %238 = vmatpush.msra.mxu0 %v237
      %v239 = vand.u32 %v76, 4294901760
      %v240 = vsub.f32 %v76, %v239
      %v241 = vand.u32 %v240, 4294901760
      %v242 = vsub.f32 %v240, %v241
      %v243 = vand.u32 %v242, 4294901760
      %244 = vmatpush.msra.mxu0 %v243
      %v245 = vand.u32 %v75, 4294901760
      %v246 = vsub.f32 %v75, %v245
      %v247 = vand.u32 %v246, 4294901760
      %v248 = vsub.f32 %v246, %v247
      %v249 = vand.u32 %v248, 4294901760
      %250 = vmatpush.msra.mxu0 %v249
      %v251 = vand.u32 %v74, 4294901760
      %v252 = vsub.f32 %v74, %v251
      %v253 = vand.u32 %v252, 4294901760
      %v254 = vsub.f32 %v252, %v253
      %v255 = vand.u32 %v254, 4294901760
      %256 = vmatpush.msra.mxu0 %v255
      %v257 = vand.u32 %v73, 4294901760
      %v258 = vsub.f32 %v73, %v257
      %v259 = vand.u32 %v258, 4294901760
      %v260 = vsub.f32 %v258, %v259
      %v261 = vand.u32 %v260, 4294901760
      %262 = vmatpush.msra.mxu0 %v261
      %v263 = vand.u32 %v72, 4294901760
      %v264 = vsub.f32 %v72, %v263
      %v265 = vand.u32 %v264, 4294901760
      %v266 = vsub.f32 %v264, %v265
      %v267 = vand.u32 %v266, 4294901760
      %268 = vmatpush.msra.mxu0 %v267
      %v269 = vand.u32 %v71, 4294901760
      %v270 = vsub.f32 %v71, %v269
      %v271 = vand.u32 %v270, 4294901760
      %v272 = vsub.f32 %v270, %v271
      %v273 = vand.u32 %v272, 4294901760
      %274 = vmatpush.msra.mxu0 %v273
      %v275 = vand.u32 %v70, 4294901760
      %v276 = vsub.f32 %v70, %v275
      %v277 = vand.u32 %v276, 4294901760
      %v278 = vsub.f32 %v276, %v277
      %v279 = vand.u32 %v278, 4294901760
      %280 = vmatpush.msra.mxu0 %v279
      %v281 = vand.u32 %v69, 4294901760
      %v282 = vsub.f32 %v69, %v281
      %v283 = vand.u32 %v282, 4294901760
      %v284 = vsub.f32 %v282, %v283
      %v285 = vand.u32 %v284, 4294901760
      %286 = vmatpush.msra.mxu0 %v285
      %v287 = vand.u32 %v68, 4294901760
      %v288 = vsub.f32 %v68, %v287
      %v289 = vand.u32 %v288, 4294901760
      %v290 = vsub.f32 %v288, %v289
      %v291 = vand.u32 %v290, 4294901760
      %292 = vmatpush.msra.mxu0 %v291
      %v293 = vand.u32 %v44, 4294901760
      %294 = vmatmul.f32.gmra.mxu0 %v293
      %v295 = vpop.f32.mrf.mxu0
      %v296 = vadd.f32 %v139, %v295
      %v297 = vand.u32 %v46, 4294901760
      %298 = vmatmul.f32.gmra.mxu0 %v297
      %v299 = vpop.f32.mrf.mxu0
      %v300 = vadd.f32 %v147, %v299
      %v301 = vand.u32 %v48, 4294901760
      %302 = vmatmul.f32.gmra.mxu0 %v301
      %v303 = vpop.f32.mrf.mxu0
      %v304 = vadd.f32 %v155, %v303
      %v305 = vand.u32 %v50, 4294901760
      %306 = vmatmul.f32.gmra.mxu0 %v305
      %v307 = vpop.f32.mrf.mxu0
      %v308 = vadd.f32 %v163, %v307
      %v309 = vand.u32 %v52, 4294901760
      %310 = vmatmul.f32.gmra.mxu0 %v309
      %v311 = vpop.f32.mrf.mxu0
      %v312 = vadd.f32 %v171, %v311
      %v313 = vand.u32 %v54, 4294901760
      %314 = vmatmul.f32.gmra.mxu0 %v313
      %v315 = vpop.f32.mrf.mxu0
      %v316 = vadd.f32 %v179, %v315
      %v317 = vand.u32 %v56, 4294901760
      %318 = vmatmul.f32.gmra.mxu0 %v317
      %v319 = vpop.f32.mrf.mxu0
      %v320 = vadd.f32 %v187, %v319
      %v321 = vand.u32 %v58, 4294901760
      %322 = vmatmul.f32.gmra.mxu0 %v321
      %v323 = vpop.f32.mrf.mxu0
      %v324 = vadd.f32 %v195, %v323
      %325 = vdwg.mxu0
      %v326 = vand.u32 %v83, 4294901760
      %v327 = vsub.f32 %v83, %v326
      %328 = vmatpush.msra.mxu0 %v327
      %v329 = vand.u32 %v82, 4294901760
      %v330 = vsub.f32 %v82, %v329
      %331 = vmatpush.msra.mxu0 %v330
      %v332 = vand.u32 %v81, 4294901760
      %v333 = vsub.f32 %v81, %v332
      %334 = vmatpush.msra.mxu0 %v333
      %v335 = vand.u32 %v80, 4294901760
      %v336 = vsub.f32 %v80, %v335
      %337 = vmatpush.msra.mxu0 %v336
      %v338 = vand.u32 %v79, 4294901760
      %v339 = vsub.f32 %v79, %v338
      %340 = vmatpush.msra.mxu0 %v339
      %v341 = vand.u32 %v78, 4294901760
      %v342 = vsub.f32 %v78, %v341
      %343 = vmatpush.msra.mxu0 %v342
      %v344 = vand.u32 %v77, 4294901760
      %v345 = vsub.f32 %v77, %v344
      %346 = vmatpush.msra.mxu0 %v345
      %v347 = vand.u32 %v76, 4294901760
      %v348 = vsub.f32 %v76, %v347
      %349 = vmatpush.msra.mxu0 %v348
      %v350 = vand.u32 %v75, 4294901760
      %v351 = vsub.f32 %v75, %v350
      %352 = vmatpush.msra.mxu0 %v351
      %v353 = vand.u32 %v74, 4294901760
      %v354 = vsub.f32 %v74, %v353
      %355 = vmatpush.msra.mxu0 %v354
      %v356 = vand.u32 %v73, 4294901760
      %v357 = vsub.f32 %v73, %v356
      %358 = vmatpush.msra.mxu0 %v357
      %v359 = vand.u32 %v72, 4294901760
      %v360 = vsub.f32 %v72, %v359
      %361 = vmatpush.msra.mxu0 %v360
      %v362 = vand.u32 %v71, 4294901760
      %v363 = vsub.f32 %v71, %v362
      %364 = vmatpush.msra.mxu0 %v363
      %v365 = vand.u32 %v70, 4294901760
      %v366 = vsub.f32 %v70, %v365
      %367 = vmatpush.msra.mxu0 %v366
      %v368 = vand.u32 %v69, 4294901760
      %v369 = vsub.f32 %v69, %v368
      %370 = vmatpush.msra.mxu0 %v369
      %v371 = vand.u32 %v68, 4294901760
      %v372 = vsub.f32 %v68, %v371
      %373 = vmatpush.msra.mxu0 %v372
      %v374 = vand.u32 %v44, 4294901760
      %v375 = vsub.f32 %v44, %v374
      %376 = vmatmul.f32.gmra.mxu0 %v375
      %v377 = vpop.f32.mrf.mxu0
      %v378 = vadd.f32 %v296, %v377
      %v379 = vand.u32 %v46, 4294901760
      %v380 = vsub.f32 %v46, %v379
      %381 = vmatmul.f32.gmra.mxu0 %v380
      %v382 = vpop.f32.mrf.mxu0
      %v383 = vadd.f32 %v300, %v382
      %v384 = vand.u32 %v48, 4294901760
      %v385 = vsub.f32 %v48, %v384
      %386 = vmatmul.f32.gmra.mxu0 %v385
      %v387 = vpop.f32.mrf.mxu0
      %v388 = vadd.f32 %v304, %v387
      %v389 = vand.u32 %v50, 4294901760
      %v390 = vsub.f32 %v50, %v389
      %391 = vmatmul.f32.gmra.mxu0 %v390
      %v392 = vpop.f32.mrf.mxu0
      %v393 = vadd.f32 %v308, %v392
      %v394 = vand.u32 %v52, 4294901760
      %v395 = vsub.f32 %v52, %v394
      %396 = vmatmul.f32.gmra.mxu0 %v395
      %v397 = vpop.f32.mrf.mxu0
      %v398 = vadd.f32 %v312, %v397
      %v399 = vand.u32 %v54, 4294901760
      %v400 = vsub.f32 %v54, %v399
      %401 = vmatmul.f32.gmra.mxu0 %v400
      %v402 = vpop.f32.mrf.mxu0
      %v403 = vadd.f32 %v316, %v402
      %v404 = vand.u32 %v56, 4294901760
      %v405 = vsub.f32 %v56, %v404
      %406 = vmatmul.f32.gmra.mxu0 %v405
      %v407 = vpop.f32.mrf.mxu0
      %v408 = vadd.f32 %v320, %v407
      %v409 = vand.u32 %v58, 4294901760
      %v410 = vsub.f32 %v58, %v409
      %411 = vmatmul.f32.gmra.mxu0 %v410
      %v412 = vpop.f32.mrf.mxu0
      %v413 = vadd.f32 %v324, %v412
      %414 = vdwg.mxu0
      %v415 = vand.u32 %v83, 4294901760
      %416 = vmatpush.msra.mxu0 %v415
      %v417 = vand.u32 %v82, 4294901760
      %418 = vmatpush.msra.mxu0 %v417
      %v419 = vand.u32 %v81, 4294901760
      %420 = vmatpush.msra.mxu0 %v419
      %v421 = vand.u32 %v80, 4294901760
      %422 = vmatpush.msra.mxu0 %v421
      %v423 = vand.u32 %v79, 4294901760
      %424 = vmatpush.msra.mxu0 %v423
      %v425 = vand.u32 %v78, 4294901760
      %426 = vmatpush.msra.mxu0 %v425
      %v427 = vand.u32 %v77, 4294901760
      %428 = vmatpush.msra.mxu0 %v427
      %v429 = vand.u32 %v76, 4294901760
      %430 = vmatpush.msra.mxu0 %v429
      %v431 = vand.u32 %v75, 4294901760
      %432 = vmatpush.msra.mxu0 %v431
      %v433 = vand.u32 %v74, 4294901760
      %434 = vmatpush.msra.mxu0 %v433
      %v435 = vand.u32 %v73, 4294901760
      %436 = vmatpush.msra.mxu0 %v435
      %v437 = vand.u32 %v72, 4294901760
      %438 = vmatpush.msra.mxu0 %v437
      %v439 = vand.u32 %v71, 4294901760
      %440 = vmatpush.msra.mxu0 %v439
      %v441 = vand.u32 %v70, 4294901760
      %442 = vmatpush.msra.mxu0 %v441
      %v443 = vand.u32 %v69, 4294901760
      %444 = vmatpush.msra.mxu0 %v443
      %v445 = vand.u32 %v68, 4294901760
      %446 = vmatpush.msra.mxu0 %v445
      %v447 = vand.u32 %v44, 4294901760
      %v448 = vsub.f32 %v44, %v447
      %v449 = vand.u32 %v448, 4294901760
      %450 = vmatmul.f32.gmra.mxu0 %v449
      %v451 = vpop.f32.mrf.mxu0
      %v452 = vadd.f32 %v378, %v451
      %v453 = vand.u32 %v46, 4294901760
      %v454 = vsub.f32 %v46, %v453
      %v455 = vand.u32 %v454, 4294901760
      %456 = vmatmul.f32.gmra.mxu0 %v455
      %v457 = vpop.f32.mrf.mxu0
      %v458 = vadd.f32 %v383, %v457
      %v459 = vand.u32 %v48, 4294901760
      %v460 = vsub.f32 %v48, %v459
      %v461 = vand.u32 %v460, 4294901760
      %462 = vmatmul.f32.gmra.mxu0 %v461
      %v463 = vpop.f32.mrf.mxu0
      %v464 = vadd.f32 %v388, %v463
      %v465 = vand.u32 %v50, 4294901760
      %v466 = vsub.f32 %v50, %v465
      %v467 = vand.u32 %v466, 4294901760
      %468 = vmatmul.f32.gmra.mxu0 %v467
      %v469 = vpop.f32.mrf.mxu0
      %v470 = vadd.f32 %v393, %v469
      %v471 = vand.u32 %v52, 4294901760
      %v472 = vsub.f32 %v52, %v471
      %v473 = vand.u32 %v472, 4294901760
      %474 = vmatmul.f32.gmra.mxu0 %v473
      %v475 = vpop.f32.mrf.mxu0
      %v476 = vadd.f32 %v398, %v475
      %v477 = vand.u32 %v54, 4294901760
      %v478 = vsub.f32 %v54, %v477
      %v479 = vand.u32 %v478, 4294901760
      %480 = vmatmul.f32.gmra.mxu0 %v479
      %v481 = vpop.f32.mrf.mxu0
      %v482 = vadd.f32 %v403, %v481
      %v483 = vand.u32 %v56, 4294901760
      %v484 = vsub.f32 %v56, %v483
      %v485 = vand.u32 %v484, 4294901760
      %486 = vmatmul.f32.gmra.mxu0 %v485
      %v487 = vpop.f32.mrf.mxu0
      %v488 = vadd.f32 %v408, %v487
      %v489 = vand.u32 %v58, 4294901760
      %v490 = vsub.f32 %v58, %v489
      %v491 = vand.u32 %v490, 4294901760
      %492 = vmatmul.f32.gmra.mxu0 %v491
      %v493 = vpop.f32.mrf.mxu0
      %v494 = vadd.f32 %v413, %v493
      %495 = vdwg.mxu0
      %v496 = vand.u32 %v83, 4294901760
      %v497 = vsub.f32 %v83, %v496
      %v498 = vand.u32 %v497, 4294901760
      %499 = vmatpush.msra.mxu0 %v498
      %v500 = vand.u32 %v82, 4294901760
      %v501 = vsub.f32 %v82, %v500
      %v502 = vand.u32 %v501, 4294901760
      %503 = vmatpush.msra.mxu0 %v502
      %v504 = vand.u32 %v81, 4294901760
      %v505 = vsub.f32 %v81, %v504
      %v506 = vand.u32 %v505, 4294901760
      %507 = vmatpush.msra.mxu0 %v506
      %v508 = vand.u32 %v80, 4294901760
      %v509 = vsub.f32 %v80, %v508
      %v510 = vand.u32 %v509, 4294901760
      %511 = vmatpush.msra.mxu0 %v510
      %v512 = vand.u32 %v79, 4294901760
      %v513 = vsub.f32 %v79, %v512
      %v514 = vand.u32 %v513, 4294901760
      %515 = vmatpush.msra.mxu0 %v514
      %v516 = vand.u32 %v78, 4294901760
      %v517 = vsub.f32 %v78, %v516
      %v518 = vand.u32 %v517, 4294901760
      %519 = vmatpush.msra.mxu0 %v518
      %v520 = vand.u32 %v77, 4294901760
      %v521 = vsub.f32 %v77, %v520
      %v522 = vand.u32 %v521, 4294901760
      %523 = vmatpush.msra.mxu0 %v522
      %v524 = vand.u32 %v76, 4294901760
      %v525 = vsub.f32 %v76, %v524
      %v526 = vand.u32 %v525, 4294901760
      %527 = vmatpush.msra.mxu0 %v526
      %v528 = vand.u32 %v75, 4294901760
      %v529 = vsub.f32 %v75, %v528
      %v530 = vand.u32 %v529, 4294901760
      %531 = vmatpush.msra.mxu0 %v530
      %v532 = vand.u32 %v74, 4294901760
      %v533 = vsub.f32 %v74, %v532
      %v534 = vand.u32 %v533, 4294901760
      %535 = vmatpush.msra.mxu0 %v534
      %v536 = vand.u32 %v73, 4294901760
      %v537 = vsub.f32 %v73, %v536
      %v538 = vand.u32 %v537, 4294901760
      %539 = vmatpush.msra.mxu0 %v538
      %v540 = vand.u32 %v72, 4294901760
      %v541 = vsub.f32 %v72, %v540
      %v542 = vand.u32 %v541, 4294901760
      %543 = vmatpush.msra.mxu0 %v542
      %v544 = vand.u32 %v71, 4294901760
      %v545 = vsub.f32 %v71, %v544
      %v546 = vand.u32 %v545, 4294901760
      %547 = vmatpush.msra.mxu0 %v546
      %v548 = vand.u32 %v70, 4294901760
      %v549 = vsub.f32 %v70, %v548
      %v550 = vand.u32 %v549, 4294901760
      %551 = vmatpush.msra.mxu0 %v550
      %v552 = vand.u32 %v69, 4294901760
      %v553 = vsub.f32 %v69, %v552
      %v554 = vand.u32 %v553, 4294901760
      %555 = vmatpush.msra.mxu0 %v554
      %v556 = vand.u32 %v68, 4294901760
      %v557 = vsub.f32 %v68, %v556
      %v558 = vand.u32 %v557, 4294901760
      %559 = vmatpush.msra.mxu0 %v558
      %v560 = vand.u32 %v44, 4294901760
      %561 = vmatmul.f32.gmra.mxu0 %v560
      %v562 = vpop.f32.mrf.mxu0
      %v563 = vadd.f32 %v452, %v562
      %v564 = vand.u32 %v46, 4294901760
      %565 = vmatmul.f32.gmra.mxu0 %v564
      %v566 = vpop.f32.mrf.mxu0
      %v567 = vadd.f32 %v458, %v566
      %v568 = vand.u32 %v48, 4294901760
      %569 = vmatmul.f32.gmra.mxu0 %v568
      %v570 = vpop.f32.mrf.mxu0
      %v571 = vadd.f32 %v464, %v570
      %v572 = vand.u32 %v50, 4294901760
      %573 = vmatmul.f32.gmra.mxu0 %v572
      %v574 = vpop.f32.mrf.mxu0
      %v575 = vadd.f32 %v470, %v574
      %v576 = vand.u32 %v52, 4294901760
      %577 = vmatmul.f32.gmra.mxu0 %v576
      %v578 = vpop.f32.mrf.mxu0
      %v579 = vadd.f32 %v476, %v578
      %v580 = vand.u32 %v54, 4294901760
      %581 = vmatmul.f32.gmra.mxu0 %v580
      %v582 = vpop.f32.mrf.mxu0
      %v583 = vadd.f32 %v482, %v582
      %v584 = vand.u32 %v56, 4294901760
      %585 = vmatmul.f32.gmra.mxu0 %v584
      %v586 = vpop.f32.mrf.mxu0
      %v587 = vadd.f32 %v488, %v586
      %v588 = vand.u32 %v58, 4294901760
      %589 = vmatmul.f32.gmra.mxu0 %v588
      %v590 = vpop.f32.mrf.mxu0
      %v591 = vadd.f32 %v494, %v590
      %592 = vdwg.mxu0
      %v593 = vand.u32 %v83, 4294901760
      %594 = vmatpush.msra.mxu0 %v593
      %v595 = vand.u32 %v82, 4294901760
      %596 = vmatpush.msra.mxu0 %v595
      %v597 = vand.u32 %v81, 4294901760
      %598 = vmatpush.msra.mxu0 %v597
      %v599 = vand.u32 %v80, 4294901760
      %600 = vmatpush.msra.mxu0 %v599
      %v601 = vand.u32 %v79, 4294901760
      %602 = vmatpush.msra.mxu0 %v601
      %v603 = vand.u32 %v78, 4294901760
      %604 = vmatpush.msra.mxu0 %v603
      %v605 = vand.u32 %v77, 4294901760
      %606 = vmatpush.msra.mxu0 %v605
      %v607 = vand.u32 %v76, 4294901760
      %608 = vmatpush.msra.mxu0 %v607
      %v609 = vand.u32 %v75, 4294901760
      %610 = vmatpush.msra.mxu0 %v609
      %v611 = vand.u32 %v74, 4294901760
      %612 = vmatpush.msra.mxu0 %v611
      %v613 = vand.u32 %v73, 4294901760
      %614 = vmatpush.msra.mxu0 %v613
      %v615 = vand.u32 %v72, 4294901760
      %616 = vmatpush.msra.mxu0 %v615
      %v617 = vand.u32 %v71, 4294901760
      %618 = vmatpush.msra.mxu0 %v617
      %v619 = vand.u32 %v70, 4294901760
      %620 = vmatpush.msra.mxu0 %v619
      %v621 = vand.u32 %v69, 4294901760
      %622 = vmatpush.msra.mxu0 %v621
      %v623 = vand.u32 %v68, 4294901760
      %624 = vmatpush.msra.mxu0 %v623
      %v625 = vand.u32 %v44, 4294901760
      %626 = vmatmul.f32.gmra.mxu0 %v625
      %v627 = vpop.f32.mrf.mxu0
      %v628 = vadd.f32 %v563, %v627
      %v629 = vand.u32 %v46, 4294901760
      %630 = vmatmul.f32.gmra.mxu0 %v629
      %v631 = vpop.f32.mrf.mxu0
      %v632 = vadd.f32 %v567, %v631
      %v633 = vand.u32 %v48, 4294901760
      %634 = vmatmul.f32.gmra.mxu0 %v633
      %v635 = vpop.f32.mrf.mxu0
      %v636 = vadd.f32 %v571, %v635
      %v637 = vand.u32 %v50, 4294901760
      %638 = vmatmul.f32.gmra.mxu0 %v637
      %v639 = vpop.f32.mrf.mxu0
      %v640 = vadd.f32 %v575, %v639
      %v641 = vand.u32 %v52, 4294901760
      %642 = vmatmul.f32.gmra.mxu0 %v641
      %v643 = vpop.f32.mrf.mxu0
      %v644 = vadd.f32 %v579, %v643
      %v645 = vand.u32 %v54, 4294901760
      %646 = vmatmul.f32.gmra.mxu0 %v645
      %v647 = vpop.f32.mrf.mxu0
      %v648 = vadd.f32 %v583, %v647
      %v649 = vand.u32 %v56, 4294901760
      %650 = vmatmul.f32.gmra.mxu0 %v649
      %v651 = vpop.f32.mrf.mxu0
      %v652 = vadd.f32 %v587, %v651
      %v653 = vand.u32 %v58, 4294901760
      %654 = vmatmul.f32.gmra.mxu0 %v653
      %v655 = vpop.f32.mrf.mxu0
      %v656 = vadd.f32 %v591, %v655
      %657 = vdwg.mxu0
      %v658 = vand.u32 %v99, 4294901760
      %659 = vmatpush.msra.mxu0 %v658
      %v660 = vand.u32 %v98, 4294901760
      %661 = vmatpush.msra.mxu0 %v660
      %v662 = vand.u32 %v97, 4294901760
      %663 = vmatpush.msra.mxu0 %v662
      %v664 = vand.u32 %v96, 4294901760
      %665 = vmatpush.msra.mxu0 %v664
      %v666 = vand.u32 %v95, 4294901760
      %667 = vmatpush.msra.mxu0 %v666
      %v668 = vand.u32 %v94, 4294901760
      %669 = vmatpush.msra.mxu0 %v668
      %v670 = vand.u32 %v93, 4294901760
      %671 = vmatpush.msra.mxu0 %v670
      %v672 = vand.u32 %v92, 4294901760
      %673 = vmatpush.msra.mxu0 %v672
      %v674 = vand.u32 %v91, 4294901760
      %675 = vmatpush.msra.mxu0 %v674
      %v676 = vand.u32 %v90, 4294901760
      %677 = vmatpush.msra.mxu0 %v676
      %v678 = vand.u32 %v89, 4294901760
      %679 = vmatpush.msra.mxu0 %v678
      %v680 = vand.u32 %v88, 4294901760
      %681 = vmatpush.msra.mxu0 %v680
      %v682 = vand.u32 %v87, 4294901760
      %683 = vmatpush.msra.mxu0 %v682
      %v684 = vand.u32 %v86, 4294901760
      %685 = vmatpush.msra.mxu0 %v684
      %v686 = vand.u32 %v85, 4294901760
      %687 = vmatpush.msra.mxu0 %v686
      %v688 = vand.u32 %v84, 4294901760
      %689 = vmatpush.msra.mxu0 %v688
      %v690 = vand.u32 %v45, 4294901760
      %v691 = vsub.f32 %v45, %v690
      %v692 = vand.u32 %v691, 4294901760
      %v693 = vsub.f32 %v691, %v692
      %v694 = vand.u32 %v693, 4294901760
      %695 = vmatmul.f32.gmra.mxu0 %v694
      %v696 = vpop.f32.mrf.mxu0
      %v697 = vadd.f32 %v628, %v696
      %v698 = vand.u32 %v47, 4294901760
      %v699 = vsub.f32 %v47, %v698
      %v700 = vand.u32 %v699, 4294901760
      %v701 = vsub.f32 %v699, %v700
      %v702 = vand.u32 %v701, 4294901760
      %703 = vmatmul.f32.gmra.mxu0 %v702
      %v704 = vpop.f32.mrf.mxu0
      %v705 = vadd.f32 %v632, %v704
      %v706 = vand.u32 %v49, 4294901760
      %v707 = vsub.f32 %v49, %v706
      %v708 = vand.u32 %v707, 4294901760
      %v709 = vsub.f32 %v707, %v708
      %v710 = vand.u32 %v709, 4294901760
      %711 = vmatmul.f32.gmra.mxu0 %v710
      %v712 = vpop.f32.mrf.mxu0
      %v713 = vadd.f32 %v636, %v712
      %v714 = vand.u32 %v51, 4294901760
      %v715 = vsub.f32 %v51, %v714
      %v716 = vand.u32 %v715, 4294901760
      %v717 = vsub.f32 %v715, %v716
      %v718 = vand.u32 %v717, 4294901760
      %719 = vmatmul.f32.gmra.mxu0 %v718
      %v720 = vpop.f32.mrf.mxu0
      %v721 = vadd.f32 %v640, %v720
      %v722 = vand.u32 %v53, 4294901760
      %v723 = vsub.f32 %v53, %v722
      %v724 = vand.u32 %v723, 4294901760
      %v725 = vsub.f32 %v723, %v724
      %v726 = vand.u32 %v725, 4294901760
      %727 = vmatmul.f32.gmra.mxu0 %v726
      %v728 = vpop.f32.mrf.mxu0
      %v729 = vadd.f32 %v644, %v728
      %v730 = vand.u32 %v55, 4294901760
      %v731 = vsub.f32 %v55, %v730
      %v732 = vand.u32 %v731, 4294901760
      %v733 = vsub.f32 %v731, %v732
      %v734 = vand.u32 %v733, 4294901760
      %735 = vmatmul.f32.gmra.mxu0 %v734
      %v736 = vpop.f32.mrf.mxu0
      %v737 = vadd.f32 %v648, %v736
      %v738 = vand.u32 %v57, 4294901760
      %v739 = vsub.f32 %v57, %v738
      %v740 = vand.u32 %v739, 4294901760
      %v741 = vsub.f32 %v739, %v740
      %v742 = vand.u32 %v741, 4294901760
      %743 = vmatmul.f32.gmra.mxu0 %v742
      %v744 = vpop.f32.mrf.mxu0
      %v745 = vadd.f32 %v652, %v744
      %v746 = vand.u32 %v59, 4294901760
      %v747 = vsub.f32 %v59, %v746
      %v748 = vand.u32 %v747, 4294901760
      %v749 = vsub.f32 %v747, %v748
      %v750 = vand.u32 %v749, 4294901760
      %751 = vmatmul.f32.gmra.mxu0 %v750
      %v752 = vpop.f32.mrf.mxu0
      %v753 = vadd.f32 %v656, %v752
      %754 = vdwg.mxu0
      %v755 = vand.u32 %v99, 4294901760
      %v756 = vsub.f32 %v99, %v755
      %v757 = vand.u32 %v756, 4294901760
      %v758 = vsub.f32 %v756, %v757
      %v759 = vand.u32 %v758, 4294901760
      %760 = vmatpush.msra.mxu0 %v759
      %v761 = vand.u32 %v98, 4294901760
      %v762 = vsub.f32 %v98, %v761
      %v763 = vand.u32 %v762, 4294901760
      %v764 = vsub.f32 %v762, %v763
      %v765 = vand.u32 %v764, 4294901760
      %766 = vmatpush.msra.mxu0 %v765
      %v767 = vand.u32 %v97, 4294901760
      %v768 = vsub.f32 %v97, %v767
      %v769 = vand.u32 %v768, 4294901760
      %v770 = vsub.f32 %v768, %v769
      %v771 = vand.u32 %v770, 4294901760
      %772 = vmatpush.msra.mxu0 %v771
      %v773 = vand.u32 %v96, 4294901760
      %v774 = vsub.f32 %v96, %v773
      %v775 = vand.u32 %v774, 4294901760
      %v776 = vsub.f32 %v774, %v775
      %v777 = vand.u32 %v776, 4294901760
      %778 = vmatpush.msra.mxu0 %v777
      %v779 = vand.u32 %v95, 4294901760
      %v780 = vsub.f32 %v95, %v779
      %v781 = vand.u32 %v780, 4294901760
      %v782 = vsub.f32 %v780, %v781
      %v783 = vand.u32 %v782, 4294901760
      %784 = vmatpush.msra.mxu0 %v783
      %v785 = vand.u32 %v94, 4294901760
      %v786 = vsub.f32 %v94, %v785
      %v787 = vand.u32 %v786, 4294901760
      %v788 = vsub.f32 %v786, %v787
      %v789 = vand.u32 %v788, 4294901760
      %790 = vmatpush.msra.mxu0 %v789
      %v791 = vand.u32 %v93, 4294901760
      %v792 = vsub.f32 %v93, %v791
      %v793 = vand.u32 %v792, 4294901760
      %v794 = vsub.f32 %v792, %v793
      %v795 = vand.u32 %v794, 4294901760
      %796 = vmatpush.msra.mxu0 %v795
      %v797 = vand.u32 %v92, 4294901760
      %v798 = vsub.f32 %v92, %v797
      %v799 = vand.u32 %v798, 4294901760
      %v800 = vsub.f32 %v798, %v799
      %v801 = vand.u32 %v800, 4294901760
      %802 = vmatpush.msra.mxu0 %v801
      %v803 = vand.u32 %v91, 4294901760
      %v804 = vsub.f32 %v91, %v803
      %v805 = vand.u32 %v804, 4294901760
      %v806 = vsub.f32 %v804, %v805
      %v807 = vand.u32 %v806, 4294901760
      %808 = vmatpush.msra.mxu0 %v807
      %v809 = vand.u32 %v90, 4294901760
      %v810 = vsub.f32 %v90, %v809
      %v811 = vand.u32 %v810, 4294901760
      %v812 = vsub.f32 %v810, %v811
      %v813 = vand.u32 %v812, 4294901760
      %814 = vmatpush.msra.mxu0 %v813
      %v815 = vand.u32 %v89, 4294901760
      %v816 = vsub.f32 %v89, %v815
      %v817 = vand.u32 %v816, 4294901760
      %v818 = vsub.f32 %v816, %v817
      %v819 = vand.u32 %v818, 4294901760
      %820 = vmatpush.msra.mxu0 %v819
      %v821 = vand.u32 %v88, 4294901760
      %v822 = vsub.f32 %v88, %v821
      %v823 = vand.u32 %v822, 4294901760
      %v824 = vsub.f32 %v822, %v823
      %v825 = vand.u32 %v824, 4294901760
      %826 = vmatpush.msra.mxu0 %v825
      %v827 = vand.u32 %v87, 4294901760
      %v828 = vsub.f32 %v87, %v827
      %v829 = vand.u32 %v828, 4294901760
      %v830 = vsub.f32 %v828, %v829
      %v831 = vand.u32 %v830, 4294901760
      %832 = vmatpush.msra.mxu0 %v831
      %v833 = vand.u32 %v86, 4294901760
      %v834 = vsub.f32 %v86, %v833
      %v835 = vand.u32 %v834, 4294901760
      %v836 = vsub.f32 %v834, %v835
      %v837 = vand.u32 %v836, 4294901760
      %838 = vmatpush.msra.mxu0 %v837
      %v839 = vand.u32 %v85, 4294901760
      %v840 = vsub.f32 %v85, %v839
      %v841 = vand.u32 %v840, 4294901760
      %v842 = vsub.f32 %v840, %v841
      %v843 = vand.u32 %v842, 4294901760
      %844 = vmatpush.msra.mxu0 %v843
      %v845 = vand.u32 %v84, 4294901760
      %v846 = vsub.f32 %v84, %v845
      %v847 = vand.u32 %v846, 4294901760
      %v848 = vsub.f32 %v846, %v847
      %v849 = vand.u32 %v848, 4294901760
      %850 = vmatpush.msra.mxu0 %v849
      %v851 = vand.u32 %v45, 4294901760
      %852 = vmatmul.f32.gmra.mxu0 %v851
      %v853 = vpop.f32.mrf.mxu0
      %v854 = vadd.f32 %v697, %v853
      %v855 = vand.u32 %v47, 4294901760
      %856 = vmatmul.f32.gmra.mxu0 %v855
      %v857 = vpop.f32.mrf.mxu0
      %v858 = vadd.f32 %v705, %v857
      %v859 = vand.u32 %v49, 4294901760
      %860 = vmatmul.f32.gmra.mxu0 %v859
      %v861 = vpop.f32.mrf.mxu0
      %v862 = vadd.f32 %v713, %v861
      %v863 = vand.u32 %v51, 4294901760
      %864 = vmatmul.f32.gmra.mxu0 %v863
      %v865 = vpop.f32.mrf.mxu0
      %v866 = vadd.f32 %v721, %v865
      %v867 = vand.u32 %v53, 4294901760
      %868 = vmatmul.f32.gmra.mxu0 %v867
      %v869 = vpop.f32.mrf.mxu0
      %v870 = vadd.f32 %v729, %v869
      %v871 = vand.u32 %v55, 4294901760
      %872 = vmatmul.f32.gmra.mxu0 %v871
      %v873 = vpop.f32.mrf.mxu0
      %v874 = vadd.f32 %v737, %v873
      %v875 = vand.u32 %v57, 4294901760
      %876 = vmatmul.f32.gmra.mxu0 %v875
      %v877 = vpop.f32.mrf.mxu0
      %v878 = vadd.f32 %v745, %v877
      %v879 = vand.u32 %v59, 4294901760
      %880 = vmatmul.f32.gmra.mxu0 %v879
      %v881 = vpop.f32.mrf.mxu0
      %v882 = vadd.f32 %v753, %v881
      %883 = vdwg.mxu0
      %v884 = vand.u32 %v99, 4294901760
      %v885 = vsub.f32 %v99, %v884
      %886 = vmatpush.msra.mxu0 %v885
      %v887 = vand.u32 %v98, 4294901760
      %v888 = vsub.f32 %v98, %v887
      %889 = vmatpush.msra.mxu0 %v888
      %v890 = vand.u32 %v97, 4294901760
      %v891 = vsub.f32 %v97, %v890
      %892 = vmatpush.msra.mxu0 %v891
      %v893 = vand.u32 %v96, 4294901760
      %v894 = vsub.f32 %v96, %v893
      %895 = vmatpush.msra.mxu0 %v894
      %v896 = vand.u32 %v95, 4294901760
      %v897 = vsub.f32 %v95, %v896
      %898 = vmatpush.msra.mxu0 %v897
      %v899 = vand.u32 %v94, 4294901760
      %v900 = vsub.f32 %v94, %v899
      %901 = vmatpush.msra.mxu0 %v900
      %v902 = vand.u32 %v93, 4294901760
      %v903 = vsub.f32 %v93, %v902
      %904 = vmatpush.msra.mxu0 %v903
      %v905 = vand.u32 %v92, 4294901760
      %v906 = vsub.f32 %v92, %v905
      %907 = vmatpush.msra.mxu0 %v906
      %v908 = vand.u32 %v91, 4294901760
      %v909 = vsub.f32 %v91, %v908
      %910 = vmatpush.msra.mxu0 %v909
      %v911 = vand.u32 %v90, 4294901760
      %v912 = vsub.f32 %v90, %v911
      %913 = vmatpush.msra.mxu0 %v912
      %v914 = vand.u32 %v89, 4294901760
      %v915 = vsub.f32 %v89, %v914
      %916 = vmatpush.msra.mxu0 %v915
      %v917 = vand.u32 %v88, 4294901760
      %v918 = vsub.f32 %v88, %v917
      %919 = vmatpush.msra.mxu0 %v918
      %v920 = vand.u32 %v87, 4294901760
      %v921 = vsub.f32 %v87, %v920
      %922 = vmatpush.msra.mxu0 %v921
      %v923 = vand.u32 %v86, 4294901760
      %v924 = vsub.f32 %v86, %v923
      %925 = vmatpush.msra.mxu0 %v924
      %v926 = vand.u32 %v85, 4294901760
      %v927 = vsub.f32 %v85, %v926
      %928 = vmatpush.msra.mxu0 %v927
      %v929 = vand.u32 %v84, 4294901760
      %v930 = vsub.f32 %v84, %v929
      %931 = vmatpush.msra.mxu0 %v930
      %v932 = vand.u32 %v45, 4294901760
      %v933 = vsub.f32 %v45, %v932
      %934 = vmatmul.f32.gmra.mxu0 %v933
      %v935 = vpop.f32.mrf.mxu0
      %v936 = vadd.f32 %v854, %v935
      %v937 = vand.u32 %v47, 4294901760
      %v938 = vsub.f32 %v47, %v937
      %939 = vmatmul.f32.gmra.mxu0 %v938
      %v940 = vpop.f32.mrf.mxu0
      %v941 = vadd.f32 %v858, %v940
      %v942 = vand.u32 %v49, 4294901760
      %v943 = vsub.f32 %v49, %v942
      %944 = vmatmul.f32.gmra.mxu0 %v943
      %v945 = vpop.f32.mrf.mxu0
      %v946 = vadd.f32 %v862, %v945
      %v947 = vand.u32 %v51, 4294901760
      %v948 = vsub.f32 %v51, %v947
      %949 = vmatmul.f32.gmra.mxu0 %v948
      %v950 = vpop.f32.mrf.mxu0
      %v951 = vadd.f32 %v866, %v950
      %v952 = vand.u32 %v53, 4294901760
      %v953 = vsub.f32 %v53, %v952
      %954 = vmatmul.f32.gmra.mxu0 %v953
      %v955 = vpop.f32.mrf.mxu0
      %v956 = vadd.f32 %v870, %v955
      %v957 = vand.u32 %v55, 4294901760
      %v958 = vsub.f32 %v55, %v957
      %959 = vmatmul.f32.gmra.mxu0 %v958
      %v960 = vpop.f32.mrf.mxu0
      %v961 = vadd.f32 %v874, %v960
      %v962 = vand.u32 %v57, 4294901760
      %v963 = vsub.f32 %v57, %v962
      %964 = vmatmul.f32.gmra.mxu0 %v963
      %v965 = vpop.f32.mrf.mxu0
      %v966 = vadd.f32 %v878, %v965
      %v967 = vand.u32 %v59, 4294901760
      %v968 = vsub.f32 %v59, %v967
      %969 = vmatmul.f32.gmra.mxu0 %v968
      %v970 = vpop.f32.mrf.mxu0
      %v971 = vadd.f32 %v882, %v970
      %972 = vdwg.mxu0
      %v973 = vand.u32 %v99, 4294901760
      %974 = vmatpush.msra.mxu0 %v973
      %v975 = vand.u32 %v98, 4294901760
      %976 = vmatpush.msra.mxu0 %v975
      %v977 = vand.u32 %v97, 4294901760
      %978 = vmatpush.msra.mxu0 %v977
      %v979 = vand.u32 %v96, 4294901760
      %980 = vmatpush.msra.mxu0 %v979
      %v981 = vand.u32 %v95, 4294901760
      %982 = vmatpush.msra.mxu0 %v981
      %v983 = vand.u32 %v94, 4294901760
      %984 = vmatpush.msra.mxu0 %v983
      %v985 = vand.u32 %v93, 4294901760
      %986 = vmatpush.msra.mxu0 %v985
      %v987 = vand.u32 %v92, 4294901760
      %988 = vmatpush.msra.mxu0 %v987
      %v989 = vand.u32 %v91, 4294901760
      %990 = vmatpush.msra.mxu0 %v989
      %v991 = vand.u32 %v90, 4294901760
      %992 = vmatpush.msra.mxu0 %v991
      %v993 = vand.u32 %v89, 4294901760
      %994 = vmatpush.msra.mxu0 %v993
      %v995 = vand.u32 %v88, 4294901760
      %996 = vmatpush.msra.mxu0 %v995
      %v997 = vand.u32 %v87, 4294901760
      %998 = vmatpush.msra.mxu0 %v997
      %v999 = vand.u32 %v86, 4294901760
      %1000 = vmatpush.msra.mxu0 %v999
      %v1001 = vand.u32 %v85, 4294901760
      %1002 = vmatpush.msra.mxu0 %v1001
      %v1003 = vand.u32 %v84, 4294901760
      %1004 = vmatpush.msra.mxu0 %v1003
      %v1005 = vand.u32 %v45, 4294901760
      %v1006 = vsub.f32 %v45, %v1005
      %v1007 = vand.u32 %v1006, 4294901760
      %1008 = vmatmul.f32.gmra.mxu0 %v1007
      %v1009 = vpop.f32.mrf.mxu0
      %v1010 = vadd.f32 %v936, %v1009
      %v1011 = vand.u32 %v47, 4294901760
      %v1012 = vsub.f32 %v47, %v1011
      %v1013 = vand.u32 %v1012, 4294901760
      %1014 = vmatmul.f32.gmra.mxu0 %v1013
      %v1015 = vpop.f32.mrf.mxu0
      %v1016 = vadd.f32 %v941, %v1015
      %v1017 = vand.u32 %v49, 4294901760
      %v1018 = vsub.f32 %v49, %v1017
      %v1019 = vand.u32 %v1018, 4294901760
      %1020 = vmatmul.f32.gmra.mxu0 %v1019
      %v1021 = vpop.f32.mrf.mxu0
      %v1022 = vadd.f32 %v946, %v1021
      %v1023 = vand.u32 %v51, 4294901760
      %v1024 = vsub.f32 %v51, %v1023
      %v1025 = vand.u32 %v1024, 4294901760
      %1026 = vmatmul.f32.gmra.mxu0 %v1025
      %v1027 = vpop.f32.mrf.mxu0
      %v1028 = vadd.f32 %v951, %v1027
      %v1029 = vand.u32 %v53, 4294901760
      %v1030 = vsub.f32 %v53, %v1029
      %v1031 = vand.u32 %v1030, 4294901760
      %1032 = vmatmul.f32.gmra.mxu0 %v1031
      %v1033 = vpop.f32.mrf.mxu0
      %v1034 = vadd.f32 %v956, %v1033
      %v1035 = vand.u32 %v55, 4294901760
      %v1036 = vsub.f32 %v55, %v1035
      %v1037 = vand.u32 %v1036, 4294901760
      %1038 = vmatmul.f32.gmra.mxu0 %v1037
      %v1039 = vpop.f32.mrf.mxu0
      %v1040 = vadd.f32 %v961, %v1039
      %v1041 = vand.u32 %v57, 4294901760
      %v1042 = vsub.f32 %v57, %v1041
      %v1043 = vand.u32 %v1042, 4294901760
      %1044 = vmatmul.f32.gmra.mxu0 %v1043
      %v1045 = vpop.f32.mrf.mxu0
      %v1046 = vadd.f32 %v966, %v1045
      %v1047 = vand.u32 %v59, 4294901760
      %v1048 = vsub.f32 %v59, %v1047
      %v1049 = vand.u32 %v1048, 4294901760
      %1050 = vmatmul.f32.gmra.mxu0 %v1049
      %v1051 = vpop.f32.mrf.mxu0
      %v1052 = vadd.f32 %v971, %v1051
      %1053 = vdwg.mxu0
      %v1054 = vand.u32 %v99, 4294901760
      %v1055 = vsub.f32 %v99, %v1054
      %v1056 = vand.u32 %v1055, 4294901760
      %1057 = vmatpush.msra.mxu0 %v1056
      %v1058 = vand.u32 %v98, 4294901760
      %v1059 = vsub.f32 %v98, %v1058
      %v1060 = vand.u32 %v1059, 4294901760
      %1061 = vmatpush.msra.mxu0 %v1060
      %v1062 = vand.u32 %v97, 4294901760
      %v1063 = vsub.f32 %v97, %v1062
      %v1064 = vand.u32 %v1063, 4294901760
      %1065 = vmatpush.msra.mxu0 %v1064
      %v1066 = vand.u32 %v96, 4294901760
      %v1067 = vsub.f32 %v96, %v1066
      %v1068 = vand.u32 %v1067, 4294901760
      %1069 = vmatpush.msra.mxu0 %v1068
      %v1070 = vand.u32 %v95, 4294901760
      %v1071 = vsub.f32 %v95, %v1070
      %v1072 = vand.u32 %v1071, 4294901760
      %1073 = vmatpush.msra.mxu0 %v1072
      %v1074 = vand.u32 %v94, 4294901760
      %v1075 = vsub.f32 %v94, %v1074
      %v1076 = vand.u32 %v1075, 4294901760
      %1077 = vmatpush.msra.mxu0 %v1076
      %v1078 = vand.u32 %v93, 4294901760
      %v1079 = vsub.f32 %v93, %v1078
      %v1080 = vand.u32 %v1079, 4294901760
      %1081 = vmatpush.msra.mxu0 %v1080
      %v1082 = vand.u32 %v92, 4294901760
      %v1083 = vsub.f32 %v92, %v1082
      %v1084 = vand.u32 %v1083, 4294901760
      %1085 = vmatpush.msra.mxu0 %v1084
      %v1086 = vand.u32 %v91, 4294901760
      %v1087 = vsub.f32 %v91, %v1086
      %v1088 = vand.u32 %v1087, 4294901760
      %1089 = vmatpush.msra.mxu0 %v1088
      %v1090 = vand.u32 %v90, 4294901760
      %v1091 = vsub.f32 %v90, %v1090
      %v1092 = vand.u32 %v1091, 4294901760
      %1093 = vmatpush.msra.mxu0 %v1092
      %v1094 = vand.u32 %v89, 4294901760
      %v1095 = vsub.f32 %v89, %v1094
      %v1096 = vand.u32 %v1095, 4294901760
      %1097 = vmatpush.msra.mxu0 %v1096
      %v1098 = vand.u32 %v88, 4294901760
      %v1099 = vsub.f32 %v88, %v1098
      %v1100 = vand.u32 %v1099, 4294901760
      %1101 = vmatpush.msra.mxu0 %v1100
      %v1102 = vand.u32 %v87, 4294901760
      %v1103 = vsub.f32 %v87, %v1102
      %v1104 = vand.u32 %v1103, 4294901760
      %1105 = vmatpush.msra.mxu0 %v1104
      %v1106 = vand.u32 %v86, 4294901760
      %v1107 = vsub.f32 %v86, %v1106
      %v1108 = vand.u32 %v1107, 4294901760
      %1109 = vmatpush.msra.mxu0 %v1108
      %v1110 = vand.u32 %v85, 4294901760
      %v1111 = vsub.f32 %v85, %v1110
      %v1112 = vand.u32 %v1111, 4294901760
      %1113 = vmatpush.msra.mxu0 %v1112
      %v1114 = vand.u32 %v84, 4294901760
      %v1115 = vsub.f32 %v84, %v1114
      %v1116 = vand.u32 %v1115, 4294901760
      %1117 = vmatpush.msra.mxu0 %v1116
      %v1118 = vand.u32 %v45, 4294901760
      %1119 = vmatmul.f32.gmra.mxu0 %v1118
      %v1120 = vpop.f32.mrf.mxu0
      %v1121 = vadd.f32 %v1010, %v1120
      %v1122 = vand.u32 %v47, 4294901760
      %1123 = vmatmul.f32.gmra.mxu0 %v1122
      %v1124 = vpop.f32.mrf.mxu0
      %v1125 = vadd.f32 %v1016, %v1124
      %v1126 = vand.u32 %v49, 4294901760
      %1127 = vmatmul.f32.gmra.mxu0 %v1126
      %v1128 = vpop.f32.mrf.mxu0
      %v1129 = vadd.f32 %v1022, %v1128
      %v1130 = vand.u32 %v51, 4294901760
      %1131 = vmatmul.f32.gmra.mxu0 %v1130
      %v1132 = vpop.f32.mrf.mxu0
      %v1133 = vadd.f32 %v1028, %v1132
      %v1134 = vand.u32 %v53, 4294901760
      %1135 = vmatmul.f32.gmra.mxu0 %v1134
      %v1136 = vpop.f32.mrf.mxu0
      %v1137 = vadd.f32 %v1034, %v1136
      %v1138 = vand.u32 %v55, 4294901760
      %1139 = vmatmul.f32.gmra.mxu0 %v1138
      %v1140 = vpop.f32.mrf.mxu0
      %v1141 = vadd.f32 %v1040, %v1140
      %v1142 = vand.u32 %v57, 4294901760
      %1143 = vmatmul.f32.gmra.mxu0 %v1142
      %v1144 = vpop.f32.mrf.mxu0
      %v1145 = vadd.f32 %v1046, %v1144
      %v1146 = vand.u32 %v59, 4294901760
      %1147 = vmatmul.f32.gmra.mxu0 %v1146
      %v1148 = vpop.f32.mrf.mxu0
      %v1149 = vadd.f32 %v1052, %v1148
      %1150 = vdwg.mxu0
      %v1151 = vand.u32 %v99, 4294901760
      %1152 = vmatpush.msra.mxu0 %v1151
      %v1153 = vand.u32 %v98, 4294901760
      %1154 = vmatpush.msra.mxu0 %v1153
      %v1155 = vand.u32 %v97, 4294901760
      %1156 = vmatpush.msra.mxu0 %v1155
      %v1157 = vand.u32 %v96, 4294901760
      %1158 = vmatpush.msra.mxu0 %v1157
      %v1159 = vand.u32 %v95, 4294901760
      %1160 = vmatpush.msra.mxu0 %v1159
      %v1161 = vand.u32 %v94, 4294901760
      %1162 = vmatpush.msra.mxu0 %v1161
      %v1163 = vand.u32 %v93, 4294901760
      %1164 = vmatpush.msra.mxu0 %v1163
      %v1165 = vand.u32 %v92, 4294901760
      %1166 = vmatpush.msra.mxu0 %v1165
      %v1167 = vand.u32 %v91, 4294901760
      %1168 = vmatpush.msra.mxu0 %v1167
      %v1169 = vand.u32 %v90, 4294901760
      %1170 = vmatpush.msra.mxu0 %v1169
      %v1171 = vand.u32 %v89, 4294901760
      %1172 = vmatpush.msra.mxu0 %v1171
      %v1173 = vand.u32 %v88, 4294901760
      %1174 = vmatpush.msra.mxu0 %v1173
      %v1175 = vand.u32 %v87, 4294901760
      %1176 = vmatpush.msra.mxu0 %v1175
      %v1177 = vand.u32 %v86, 4294901760
      %1178 = vmatpush.msra.mxu0 %v1177
      %v1179 = vand.u32 %v85, 4294901760
      %1180 = vmatpush.msra.mxu0 %v1179
      %v1181 = vand.u32 %v84, 4294901760
      %1182 = vmatpush.msra.mxu0 %v1181
      %v1183 = vand.u32 %v45, 4294901760
      %1184 = vmatmul.f32.gmra.mxu0 %v1183
      %v1185 = vpop.f32.mrf.mxu0
      %v1186 = vadd.f32 %v1121, %v1185
      %v1187 = vand.u32 %v47, 4294901760
      %1188 = vmatmul.f32.gmra.mxu0 %v1187
      %v1189 = vpop.f32.mrf.mxu0
      %v1190 = vadd.f32 %v1125, %v1189
      %v1191 = vand.u32 %v49, 4294901760
      %1192 = vmatmul.f32.gmra.mxu0 %v1191
      %v1193 = vpop.f32.mrf.mxu0
      %v1194 = vadd.f32 %v1129, %v1193
      %v1195 = vand.u32 %v51, 4294901760
      %1196 = vmatmul.f32.gmra.mxu0 %v1195
      %v1197 = vpop.f32.mrf.mxu0
      %v1198 = vadd.f32 %v1133, %v1197
      %v1199 = vand.u32 %v53, 4294901760
      %1200 = vmatmul.f32.gmra.mxu0 %v1199
      %v1201 = vpop.f32.mrf.mxu0
      %v1202 = vadd.f32 %v1137, %v1201
      %v1203 = vand.u32 %v55, 4294901760
      %1204 = vmatmul.f32.gmra.mxu0 %v1203
      %v1205 = vpop.f32.mrf.mxu0
      %v1206 = vadd.f32 %v1141, %v1205
      %v1207 = vand.u32 %v57, 4294901760
      %1208 = vmatmul.f32.gmra.mxu0 %v1207
      %v1209 = vpop.f32.mrf.mxu0
      %v1210 = vadd.f32 %v1145, %v1209
      %v1211 = vand.u32 %v59, 4294901760
      %1212 = vmatmul.f32.gmra.mxu0 %v1211
      %v1213 = vpop.f32.mrf.mxu0
      %v1214 = vadd.f32 %v1149, %v1213
      %1215 = vdwg.mxu0
      %s1216 = smul.u32 %s61, 64
      %s1217 = scalar_lea.vmem [#allocation7], %s1216
      %1218 = vst [vmem:[%s1217] sm:$0xff] %v1186
      %1219 = vst [vmem:[%s1217 + $0x8] sm:$0xff] %v1190
      %1220 = vst [vmem:[%s1217 + $0x10] sm:$0xff] %v1194
      %1221 = vst [vmem:[%s1217 + $0x18] sm:$0xff] %v1198
      %1222 = vst [vmem:[%s1217 + $0x20] sm:$0xff] %v1202
      %1223 = vst [vmem:[%s1217 + $0x28] sm:$0xff] %v1206
      %1224 = vst [vmem:[%s1217 + $0x30] sm:$0xff] %v1210
      %1225 = vst [vmem:[%s1217 + $0x38] sm:$0xff] %v1214
    $region22: #{token_down_layer.1} parent=1 // loop_footer
      %s65 = sadd.s32 1, %s61
    $region23: #{token_down_layer.1} parent=1 // loop_footer_branch
      %60 = sbr.rel target = $region19
    $region24: #{token_down_layer.1} parent=1 // loop_exit
      _
    // Predicated region
    $region25: #{token_down_layer.1} parent=1 // pred_check
      _
    $region26: #{token_down_layer.1} parent=1 // pred_check_branch
      %1227 = sbr.rel (0) target = $region28
    $region27: #{token_down_layer.1} parent=1 // pred_region
      %1229 = vsyncadd [#allocation4], 0
      %s1230 = sshll.u32 [#allocation7], 4
      %s1231 = int_to_ptr.vmem [resolvable:$true] %s1230
      %s1232 = sshll.u32 %s2, 4
      %s1233 = int_to_ptr.hbm [resolvable:$true] %s1232
      %1238 = dma.vmem_to_hbm [thread:$0]  %s1231, 2048, %s1233, [#allocation4], 128, 128, 8
    $region28: #{token_down_layer.1} parent=1 // pred_fallthru
      _
    // Predicated region
    $region29: #{token_down_layer.1} parent=1 // pred_check
      _
    $region30: #{token_down_layer.1} parent=1 // pred_check_branch
      %1240 = sbr.rel (0) target = $region32
    $region31: #{token_down_layer.1} parent=1 // pred_region
      %1242 = dma.done [#allocation4], 2048
    $region32: #{token_down_layer.1} parent=1 // pred_fallthru
      _
    %1243 = vsyncpa [#allocation3], 1
    %1244 = vsyncpa [#allocation6], 1
    %1245 = vsyncpa [#allocation4], 1

</llo_original>
